<compile_context>
chip_gen: v7x
topology: tpu7x:2x2x1
jax: 0.10.0
libtpu: 0.0.40
codegen_flags: <defaults>
</compile_context>

<pallas_src>
import functools

import jax
import jax.numpy as jnp
from jax.experimental import pallas as pl
from jax.experimental.pallas import tpu as pltpu

_LANES = 128
_ACC_ROWS = 8            # vreg-height partial accumulator
_CHUNK_ROWS = 256        # per-fori-loop-step chunk: (256,128) f32 = 32 vregs
_MAX_TILE_ROWS = 4096    # (4096,128) f32 block = 2 MiB per pipeline buffer
_VMEM_LIMIT = 32 * 1024 * 1024


def _round_up(x, m):
    return ((x + m - 1) // m) * m


# --------------------------------------------------------------------------
# In-kernel helpers
# --------------------------------------------------------------------------
def _tile_partial(load_chunk, base_row, *, rows_valid, tile_rows, chunk_rows,
                  acc_rows, masked):
    """f32 (acc_rows, 128) partial sum of the current (tile_rows, 128) tile.

    Walks the tile in `chunk_rows`-row chunks so only ~chunk_rows/8 f32 vregs
    are live at once.  `masked` is a *static* flag: the straddling tile zeroes
    rows >= rows_valid, interior tiles stay pure vld + vadd.
    """
    n_chunks = tile_rows // chunk_rows

    def one_chunk(start):
        x = load_chunk(start)                              # f32 (chunk_rows, 128)
        if masked:
            row_ids = (base_row + start) + jax.lax.broadcasted_iota(
                jnp.int32, (chunk_rows, _LANES), 0)
            x = jnp.where(row_ids < rows_valid, x, 0.0)
        if chunk_rows == acc_rows:
            return x
        if acc_rows == 1:                                  # tiny single-tile case
            return jnp.sum(x, axis=0, keepdims=True)
        return jnp.sum(x.reshape(chunk_rows // acc_rows, acc_rows, _LANES), axis=0)

    if n_chunks == 1:
        return one_chunk(0)

    def body(c, acc):
        start = pl.multiple_of(c * chunk_rows, chunk_rows)
        return acc + one_chunk(start)

    return jax.lax.fori_loop(0, n_chunks, body,
                             jnp.zeros((acc_rows, _LANES), jnp.float32))


def _accumulate(load_chunk, out_ref, *, rows_valid, tile_rows, chunk_rows,
                acc_rows, steps_per_split, ragged, redundant):
    """Accumulate this grid step's tile into the per-split (acc_rows,128) block."""
    i = pl.program_id(1)

    @pl.when(i == 0)
    def _():
        out_ref[...] = jnp.zeros_like(out_ref)

    base_row = (pl.program_id(0) * steps_per_split + i) * tile_rows
    kw = dict(rows_valid=rows_valid, tile_rows=tile_rows,
              chunk_rows=chunk_rows, acc_rows=acc_rows)

    if not (ragged or redundant):
        # Every tile is full and in-bounds: unconditional fast path.
        out_ref[...] += _tile_partial(load_chunk, base_row, masked=False, **kw)[None]
        return

    is_full = base_row + tile_rows <= rows_valid

    @pl.when(is_full)
    def _():
        out_ref[...] += _tile_partial(load_chunk, base_row, masked=False, **kw)[None]

    if ragged:
        # Only the single straddling tile pays for the iota mask.
        @pl.when(jnp.logical_and(jnp.logical_not(is_full), base_row < rows_valid))
        def _():
            out_ref[...] += _tile_partial(load_chunk, base_row, masked=True, **kw)[None]
    # Fully-redundant clamped tail steps (base_row >= rows_valid) do nothing.


def _sum_kernel(x_ref, out_ref, *, rows_valid, tile_rows, chunk_rows, acc_rows,
                steps_per_split, ragged, redundant):
    def load(start):
        return x_ref[pl.ds(start, chunk_rows), :].astype(jnp.float32)

    _accumulate(load, out_ref, rows_valid=rows_valid, tile_rows=tile_rows,
                chunk_rows=chunk_rows, acc_rows=acc_rows,
                steps_per_split=steps_per_split, ragged=ragged, redundant=redundant)


def _diff_sum_kernel(real_ref, fake_ref, out_ref, *, rows_valid, tile_rows,
                     chunk_rows, acc_rows, steps_per_split, ragged, redundant):
    def load(start):
        f = fake_ref[pl.ds(start, chunk_rows), :].astype(jnp.float32)
        r = real_ref[pl.ds(start, chunk_rows), :].astype(jnp.float32)
        return f - r        # diff per chunk: halves live f32 values

    _accumulate(load, out_ref, rows_valid=rows_valid, tile_rows=tile_rows,
                chunk_rows=chunk_rows, acc_rows=acc_rows,
                steps_per_split=steps_per_split, ragged=ragged, redundant=redundant)


# --------------------------------------------------------------------------
# Host-side planning / wrappers
# --------------------------------------------------------------------------
def _plan(rows):
    """Choose tile/chunk/accumulator sizes and the 2-core split for `rows`."""
    if rows < 2 * _ACC_ROWS:
        acc_rows = _ACC_ROWS if rows % _ACC_ROWS == 0 else 1
        return dict(tile_rows=rows, chunk_rows=rows, acc_rows=acc_rows,
                    num_splits=1, steps_per_split=1, total_steps=1)

    half = pl.cdiv(rows, 2)
    if half <= _CHUNK_ROWS:
        tile_rows = _round_up(half, _ACC_ROWS)
    else:
        tile_rows = min(_MAX_TILE_ROWS, _round_up(half, _CHUNK_ROWS))
    total_steps = pl.cdiv(rows, tile_rows)
    # 2-way split (v7x megacore) unless it would waste a whole redundant tile
    # on a small odd step count.
    num_splits = 2 if (total_steps % 2 == 0 or total_steps >= 8) else 1
    steps_per_split = pl.cdiv(total_steps, num_splits)
    chunk_rows = min(_CHUNK_ROWS, tile_rows)
    return dict(tile_rows=tile_rows, chunk_rows=chunk_rows, acc_rows=_ACC_ROWS,
                num_splits=num_splits, steps_per_split=steps_per_split,
                total_steps=total_steps)


def _reduce_call(kernel, inputs, rows):
    """Run `kernel` over (rows, 128) inputs; returns the f32 scalar total sum."""
    p = _plan(rows)
    tile_rows, chunk_rows, acc_rows = p["tile_rows"], p["chunk_rows"], p["acc_rows"]
    num_splits, steps_per_split = p["num_splits"], p["steps_per_split"]
    total_steps = p["total_steps"]
    ragged = (rows % tile_rows) != 0
    redundant = (num_splits * steps_per_split) != total_steps

    def in_map(c, i):
        g = c * steps_per_split + i
        return (jnp.minimum(g, total_steps - 1), 0)   # clamp redundant tail steps

    kern = functools.partial(
        kernel, rows_valid=rows, tile_rows=tile_rows, chunk_rows=chunk_rows,
        acc_rows=acc_rows, steps_per_split=steps_per_split,
        ragged=ragged, redundant=redundant)

    in_bytes = sum(int(x.size) * x.dtype.itemsize for x in inputs)
    cost = pl.CostEstimate(
        flops=sum(int(x.size) for x in inputs), transcendentals=0,
        bytes_accessed=in_bytes + num_splits * acc_rows * _LANES * 4)

    out = pl.pallas_call(
        kern,
        out_shape=jax.ShapeDtypeStruct((num_splits, acc_rows, _LANES), jnp.float32),
        grid_spec=pltpu.PrefetchScalarGridSpec(
            num_scalar_prefetch=0,
            grid=(num_splits, steps_per_split),
            in_specs=[pl.BlockSpec((tile_rows, _LANES), in_map)] * len(inputs),
            out_specs=pl.BlockSpec((1, acc_rows, _LANES), lambda c, i: (c, 0, 0)),
        ),
        compiler_params=pltpu.CompilerParams(
            dimension_semantics=("parallel", "arbitrary"),
            vmem_limit_bytes=_VMEM_LIMIT),
        cost_estimate=cost,
    )(*inputs)
    # Tiny (<= 2*8*128 element) final combine: plain-JAX scalar glue.
    return jnp.sum(out)


def _prep(x):
    """Split x into a lane-dense (rows,128) aligned prefix + a <128-elem tail.

    No jnp.pad: the aligned prefix reshape is free; only the tiny tail (if any)
    is handled by plain-JAX glue.
    """
    flat = x.reshape(-1)
    n = flat.size
    rows = n // _LANES
    n_main = rows * _LANES
    main = None
    if rows > 0:
        main = (flat if n_main == n else flat[:n_main]).reshape(rows, _LANES)
    tail = flat[n_main:] if n_main < n else None
    return main, tail, rows, n


def _sum_all(x):
    """f32 total sum of all elements of x (Pallas for the aligned bulk)."""
    main, tail, rows, n = _prep(x)
    s = jnp.float32(0.0)
    if rows > 0:
        s = s + _reduce_call(_sum_kernel, [main], rows)
    if tail is not None:
        s = s + jnp.sum(tail, dtype=jnp.float32)
    return s, n


def wasserstein_loss(real, fake=None):
    """JAX/Pallas equivalent of WassersteinLoss.forward."""
    if fake is None:
        s, n = _sum_all(real)
        return -s * (1.0 / n)

    if fake.shape == real.shape and real.size >= _LANES:
        # Single fused pass over both inputs: loss = sum(fake - real) / n.
        main_r, tail_r, rows, n = _prep(real)
        main_f, tail_f, _, _ = _prep(fake)
        s = _reduce_call(_diff_sum_kernel, [main_r, main_f], rows)
        if tail_r is not None:
            s = s + jnp.sum(tail_f, dtype=jnp.float32) - jnp.sum(tail_r, dtype=jnp.float32)
        return s * (1.0 / n)

    # Different shapes (or sub-vreg inputs): two independent reductions.
    s_r, n_r = _sum_all(real)
    s_f, n_f = _sum_all(fake)
    return -s_r * (1.0 / n_r) + s_f * (1.0 / n_f)


if __name__ == "__main__":
    key = jax.random.PRNGKey(0)
    k1, k2, k3, k4, k5, k6 = jax.random.split(key, 6)

    # Small NCHW-like GAN critic outputs.
    real = jax.random.normal(k1, (2, 4, 16, 16), dtype=jnp.float32)
    fake = jax.random.normal(k2, (2, 4, 16, 16), dtype=jnp.float32)

    loss_rf = wasserstein_loss(real, fake)
    jax.block_until_ready(loss_rf)
    ref_rf = -jnp.mean(real) + jnp.mean(fake)
    assert jnp.allclose(loss_rf, ref_rf, atol=1e-5), (loss_rf, ref_rf)

    loss_r = wasserstein_loss(real)
    jax.block_until_ready(loss_r)
    ref_r = -jnp.mean(real)
    assert jnp.allclose(loss_r, ref_r, atol=1e-5), (loss_r, ref_r)

    # Larger input exercising the 2-split / chunked fori / masked-straddler path.
    big_r = jax.random.normal(k3, (2, 4, 130, 128), dtype=jnp.float32)
    big_f = jax.random.normal(k4, (2, 4, 130, 128), dtype=jnp.float32)
    loss_big = wasserstein_loss(big_r, big_f)
    jax.block_until_ready(loss_big)
    ref_big = -jnp.mean(big_r) + jnp.mean(big_f)
    assert jnp.allclose(loss_big, ref_big, atol=1e-5), (loss_big, ref_big)

    # Element count not a multiple of 128: aligned prefix via Pallas,
    # lane tail via plain-JAX glue (no jnp.pad HBM pass).
    odd_r = jax.random.normal(k5, (2, 4, 33), dtype=jnp.float32)   # 264 elems
    odd_f = jax.random.normal(k6, (2, 4, 33), dtype=jnp.float32)
    loss_odd = wasserstein_loss(odd_r, odd_f)
    jax.block_until_ready(loss_odd)
    ref_odd = -jnp.mean(odd_r) + jnp.mean(odd_f)
    assert jnp.allclose(loss_odd, ref_odd, atol=1e-5), (loss_odd, ref_odd)

    print("KERNEL_OK")
</pallas_src>

<mosaic_0001>
module attributes {stable_mosaic.version = 11 : i64} {
  func.func @_diff_sum_kernel(%arg0: i32, %arg1: i32, %arg2: memref<8x128xf32, #tpu.memory_space<vmem>>, %arg3: memref<8x128xf32, #tpu.memory_space<vmem>>, %arg4: memref<1x8x128xf32, #tpu.memory_space<vmem>>) attributes {dimension_semantics = [#tpu.dimension_semantics<parallel>, #tpu.dimension_semantics<arbitrary>], iteration_bounds = array<i64: 2, 1>, scalar_prefetch = 0 : i64, scratch_operands = 0 : i64, tpu.core_type = #tpu.core_type<tc>, window_params = [{transform_indices = @transform_0, window_bounds = array<i64: 8, 128>}, {transform_indices = @transform_1, window_bounds = array<i64: 8, 128>}, {transform_indices = @transform_2, window_bounds = array<i64: 1, 8, 128>}]} {
    %c0_i32 = arith.constant 0 : i32
    %0 = arith.cmpi eq, %arg1, %c0_i32 : i32
    %1 = arith.extui %0 : i1 to i32
    %c0_i32_0 = arith.constant 0 : i32
    %2 = arith.cmpi ne, %1, %c0_i32_0 : i32
    scf.if %2 {
      %cst = arith.constant 0.000000e+00 : f32
      %10 = vector.broadcast %cst : f32 to vector<1x8x128xf32>
      %c0_10 = arith.constant 0 : index
      %c0_11 = arith.constant 0 : index
      %c0_12 = arith.constant 0 : index
      %11 = vector.load %arg4[%c0_10, %c0_11, %c0_12] : memref<1x8x128xf32, #tpu.memory_space<vmem>>, vector<1x8x128xf32>
      tpu.vector_store %arg4[%c0_10, %c0_11, %c0_12], %10 {strides = array<i32>} : memref<1x8x128xf32, #tpu.memory_space<vmem>>, vector<1x8x128xf32>,
    } else {
    }
    %c0 = arith.constant 0 : index
    %c0_1 = arith.constant 0 : index
    %c0_2 = arith.constant 0 : index
    %3 = vector.load %arg4[%c0, %c0_1, %c0_2] : memref<1x8x128xf32, #tpu.memory_space<vmem>>, vector<1x8x128xf32>
    %c0_3 = arith.constant 0 : index
    %c0_4 = arith.constant 0 : index
    %4 = vector.load %arg3[%c0_3, %c0_4] : memref<8x128xf32, #tpu.memory_space<vmem>>, vector<8x128xf32>
    %c0_5 = arith.constant 0 : index
    %c0_6 = arith.constant 0 : index
    %5 = vector.load %arg2[%c0_5, %c0_6] : memref<8x128xf32, #tpu.memory_space<vmem>>, vector<8x128xf32>
    %6 = arith.subf %4, %5 : vector<8x128xf32>
    %7 = vector.shape_cast %6 : vector<8x128xf32> to vector<1x8x128xf32>
    %8 = arith.addf %3, %7 : vector<1x8x128xf32>
    %c0_7 = arith.constant 0 : index
    %c0_8 = arith.constant 0 : index
    %c0_9 = arith.constant 0 : index
    %9 = vector.load %arg4[%c0_7, %c0_8, %c0_9] : memref<1x8x128xf32, #tpu.memory_space<vmem>>, vector<1x8x128xf32>
    tpu.vector_store %arg4[%c0_7, %c0_8, %c0_9], %8 {strides = array<i32>} : memref<1x8x128xf32, #tpu.memory_space<vmem>>, vector<1x8x128xf32>,
    return
  }
  func.func @transform_0(%arg0: i32, %arg1: i32) -> (i32, i32) {
    %c1_i32 = arith.constant 1 : i32
    %0 = arith.muli %arg0, %c1_i32 : i32
    %1 = arith.addi %0, %arg1 : i32
    %c1_i32_0 = arith.constant 1 : i32
    %2 = arith.minsi %1, %c1_i32_0 : i32
    %c0_i32 = arith.constant 0 : i32
    %c0_i32_1 = arith.constant 0 : i32
    return %2, %c0_i32 : i32, i32
  }
  func.func @transform_1(%arg0: i32, %arg1: i32) -> (i32, i32) {
    %c1_i32 = arith.constant 1 : i32
    %0 = arith.muli %arg0, %c1_i32 : i32
    %1 = arith.addi %0, %arg1 : i32
    %c1_i32_0 = arith.constant 1 : i32
    %2 = arith.minsi %1, %c1_i32_0 : i32
    %c0_i32 = arith.constant 0 : i32
    %c0_i32_1 = arith.constant 0 : i32
    return %2, %c0_i32 : i32, i32
  }
  func.func @transform_2(%arg0: i32, %arg1: i32) -> (i32, i32, i32) {
    %c0_i32 = arith.constant 0 : i32
    %c0_i32_0 = arith.constant 0 : i32
    %c0_i32_1 = arith.constant 0 : i32
    return %arg0, %c0_i32, %c0_i32_0 : i32, i32, i32
  }
}

</mosaic_0001>

<llo_original>
// kernel: tpu_custom_call.1
$region0: #{tpu_custom_call.1}
  #allocation0 [shape = 'u32[]', space=smem, size = 0x4, offset = 0x4, fixed_abs, tag = 'smem constant byte address 0x4 - core index']
  #allocation1 [shape = 'u32[144,128]{1,0:T(1,128)}', space=vmem, size = 0x12000, scoped, tag = 'internal scratch']
  %s0 = inlined_call_operand.hbm [shape: f32[16,128], index: 0, kind: input, shape index: {}]
  %s1 = inlined_call_operand.hbm [shape: f32[16,128], index: 1, kind: input, shape index: {}]
  %s2 = inlined_call_operand.hbm [shape: f32[2,8,128], index: 2, kind: output, shape index: {}]
  %s3 = sld [smem:[#allocation0]]
  $region53: #{tpu_custom_call.1} parent=0
    _
  %s5 = ssub.s32 1, %s3
  %s6 = scalar_select 0, %s5, %s3
  $region1: #{tpu_custom_call.1} parent=0
    #allocation2 [shape = 'u8[8192]{0}', space=vmem, size = 0x2000, scoped, tag = 'input window, operand 0']
    #allocation3 [shape = 's32[2]{0}', space=sflag, size = 0x8, scoped, tag = 'scoped memory for tpu_custom_call.1']
    #allocation4 [shape = 's32[2]{0}', space=sflag, size = 0x8, scoped, tag = 'scoped memory for tpu_custom_call.1']
    #allocation5 [shape = 'u8[8192]{0}', space=vmem, size = 0x2000, scoped, tag = 'input window, operand 1']
    #allocation6 [shape = 's32[2]{0}', space=sflag, size = 0x8, scoped, tag = 'scoped memory for tpu_custom_call.1']
    #allocation7 [shape = 'u8[8192]{0}', space=vmem, size = 0x2000, scoped, tag = 'output window, operand 0']
    %7 = vsyncpa [#allocation3], 0
    %s8 = scalar_lea.sflag [#allocation3], 1
    %9 = vsyncpa %s8, 0
    %10 = vsyncpa [#allocation6], 0
    %s11 = scalar_lea.sflag [#allocation6], 1
    %12 = vsyncpa %s11, 0
    %13 = vsyncpa [#allocation4], 0
    %s14 = scalar_lea.sflag [#allocation4], 1
    %15 = vsyncpa %s14, 0
    loop: start=0, step=1, limit=4
    $region2: #{tpu_custom_call.1} parent=1 // loop_pre_header
      _
    $region3: #{tpu_custom_call.1} parent=1 // loop_header
      %s17 = sphi 0, %s21
      %p18 = scmp.ge.s32.totalorder %s17, 4
      %s24 = sphi 0, %s36
      %s25 = sphi 0, %s32
      %s26 = sphi 0, %s24
      %s27 = sphi 0, %s25
      %s28 = sphi 0, %s26
      %s29 = sphi 0, %s27
      %s45 = sphi 0, %s47
      %s48 = sphi 0, %s45
      %s49 = sphi 0, %s48
      %s65 = sphi 0, %s49
      %s77 = sphi 0, %s79
      %s80 = sphi 0, %s77
      %s81 = sphi 0, %s80
      %s97 = sphi 0, %s81
      %s103 = sphi 0, %s105
      %s106 = sphi 0, %s103
      %s107 = sphi 0, %s106
      %s123 = sphi 0, %s107
    $region4: #{tpu_custom_call.1} parent=1 // loop_header_branch
      %20 = sbr.rel (%p18) target = $region8
    $region5: #{tpu_custom_call.1} parent=1 // loop_body
      %s22 = ssub.s32 %s17, 1
      %s23 = ssub.s32 %s17, 2
      %s30 = sadd.s32 1, %s25
      %p31 = scmp.ge.s32.totalorder %s30, 1
      %s32 = scalar_select %p31, 0, %s30
      %s33 = sadd.s32 1, %s24
      %s34 = scalar_select %p31, %s33, %s24
      %p35 = scmp.ge.s32.totalorder %s34, 2
      %s36 = scalar_select %p35, 0, %s34
      %s37 = sadd.s32 %s24, %s25
      %p38 = scmp.lt.s32.totalorder %s37, 1
      %s39 = scalar_select %p38, %s37, 1
      %s40 = sadd.s32 %s36, %s32
      %p41 = scmp.lt.s32.totalorder %s40, 1
      %s42 = scalar_select %p41, %s40, 1
      %s43 = ssub.s32 %s39, %s42
      %p44 = scmp.eq.s32.totalorder %s43, 0
      %s46 = sadd.s32 %s45, 1
      %s47 = scalar_select %p44, %s45, %s46
      %p50 = pneg %p44
      %p51 = scmp.eq.s32.totalorder %s17, 1
      %p52 = por %p50, %p51
      %p53 = scmp.ne.s32.totalorder %s45, %s48
      %p54 = scmp.eq.s32.totalorder %s17, 0
      %p55 = por %p53, %p54
      %p56 = scmp.ne.s32.totalorder %s45, %s48
      %p57 = scmp.eq.s32.totalorder %s22, 1
      %p58 = por %p56, %p57
      %p59 = scmp.ne.s32.totalorder %s48, %s49
      %p60 = scmp.eq.s32.totalorder %s22, 0
      %p61 = por %p59, %p60
      %p62 = scmp.ne.s32.totalorder %s48, %s49
      %p63 = scmp.eq.s32.totalorder %s23, 1
      %p64 = por %p62, %p63
      %p66 = scmp.ne.s32.totalorder %s49, %s65
      %p67 = scmp.eq.s32.totalorder %s23, 0
      %p68 = por %p66, %p67
      %s69 = sadd.s32 %s24, %s25
      %p70 = scmp.lt.s32.totalorder %s69, 1
      %s71 = scalar_select %p70, %s69, 1
      %s72 = sadd.s32 %s36, %s32
      %p73 = scmp.lt.s32.totalorder %s72, 1
      %s74 = scalar_select %p73, %s72, 1
      %s75 = ssub.s32 %s71, %s74
      %p76 = scmp.eq.s32.totalorder %s75, 0
      %s78 = sadd.s32 %s77, 1
      %s79 = scalar_select %p76, %s77, %s78
      %p82 = pneg %p76
      %p83 = scmp.eq.s32.totalorder %s17, 1
      %p84 = por %p82, %p83
      %p85 = scmp.ne.s32.totalorder %s77, %s80
      %p86 = scmp.eq.s32.totalorder %s17, 0
      %p87 = por %p85, %p86
      %p88 = scmp.ne.s32.totalorder %s77, %s80
      %p89 = scmp.eq.s32.totalorder %s22, 1
      %p90 = por %p88, %p89
      %p91 = scmp.ne.s32.totalorder %s80, %s81
      %p92 = scmp.eq.s32.totalorder %s22, 0
      %p93 = por %p91, %p92
      %p94 = scmp.ne.s32.totalorder %s80, %s81
      %p95 = scmp.eq.s32.totalorder %s23, 1
      %p96 = por %p94, %p95
      %p98 = scmp.ne.s32.totalorder %s81, %s97
      %p99 = scmp.eq.s32.totalorder %s23, 0
      %p100 = por %p98, %p99
      %s101 = ssub.s32 %s24, %s36
      %p102 = scmp.eq.s32.totalorder %s101, 0
      %s104 = sadd.s32 %s103, 1
      %s105 = scalar_select %p102, %s103, %s104
      %p108 = pneg %p102
      %p109 = scmp.eq.s32.totalorder %s17, 1
      %p110 = por %p108, %p109
      %p111 = scmp.ne.s32.totalorder %s103, %s106
      %p112 = scmp.eq.s32.totalorder %s17, 0
      %p113 = por %p111, %p112
      %p114 = scmp.ne.s32.totalorder %s103, %s106
      %p115 = scmp.eq.s32.totalorder %s22, 1
      %p116 = por %p114, %p115
      %p117 = scmp.ne.s32.totalorder %s106, %s107
      %p118 = scmp.eq.s32.totalorder %s22, 0
      %p119 = por %p117, %p118
      %p120 = scmp.ne.s32.totalorder %s106, %s107
      %p121 = scmp.eq.s32.totalorder %s23, 1
      %p122 = por %p120, %p121
      %p124 = scmp.ne.s32.totalorder %s107, %s123
      %p125 = scmp.eq.s32.totalorder %s23, 0
      %p126 = por %p124, %p125
      %p127 = scmp.le.s32.totalorder 1, %s17
      %p128 = scmp.lt.s32.totalorder %s17, 3
      %p129 = pnand %p127, %p128
      %p130 = pneg %p129
      // Predicated region
      $region9: #{tpu_custom_call.1} parent=5 // pred_check
        _
      $region10: #{tpu_custom_call.1} parent=5 // pred_check_branch
        %132 = sbr.rel (%p129) target = $region12
      $region11: #{tpu_custom_call.1} parent=5 // pred_region
        %s133 = ssub.s32 %s17, 1
      $region12: #{tpu_custom_call.1} parent=5 // pred_fallthru
        _
      %p134 = scmp.lt.s32.totalorder %s17, 2
      // Predicated region
      $region13: #{tpu_custom_call.1} parent=5 // pred_check
        %p135 = pneg %p134
      $region14: #{tpu_custom_call.1} parent=5 // pred_check_branch
        %137 = sbr.rel (%p135) target = $region16
      $region15: #{tpu_custom_call.1} parent=5 // pred_region
        // Predicated region
        $region17: #{tpu_custom_call.1} parent=15 // pred_check
          %p138 = pneg %p55
        $region18: #{tpu_custom_call.1} parent=15 // pred_check_branch
          %140 = sbr.rel (%p138) target = $region20
        $region19: #{tpu_custom_call.1} parent=15 // pred_region
          %s141 = sand.u32 %s45, 1
          %s142 = scalar_lea.sflag [#allocation3], %s141
          %s143 = sand.u32 %s45, 1
          %s144 = smul.addr %s143, 8
          %s145 = scalar_lea.vmem [#allocation2], %s144
          %s146 = sadd.s32 %s24, %s25
          %p147 = scmp.lt.s32.totalorder %s146, 1
          %s148 = scalar_select %p147, %s146, 1
          %s150 = ssub.s32 128, 128
          %151 = vsyncadd %s142, %s150
          %s152 = smul.addr %s148, 128
          %s153 = scalar_lea.hbm %s0, %s152
          %s155 = sshll.u32 %s145, 4
          %s156 = int_to_ptr.vmem [resolvable:$true] %s155
          %158 = dma.hbm_to_vmem [thread:$0]  %s153, 128, %s156, %s142
        $region20: #{tpu_custom_call.1} parent=15 // pred_fallthru
          _
        // Predicated region
        $region21: #{tpu_custom_call.1} parent=15 // pred_check
          %p159 = pneg %p87
        $region22: #{tpu_custom_call.1} parent=15 // pred_check_branch
          %161 = sbr.rel (%p159) target = $region24
        $region23: #{tpu_custom_call.1} parent=15 // pred_region
          %s162 = sand.u32 %s77, 1
          %s163 = scalar_lea.sflag [#allocation6], %s162
          %s164 = sand.u32 %s77, 1
          %s165 = smul.addr %s164, 8
          %s166 = scalar_lea.vmem [#allocation5], %s165
          %s167 = sadd.s32 %s24, %s25
          %p168 = scmp.lt.s32.totalorder %s167, 1
          %s169 = scalar_select %p168, %s167, 1
          %s171 = ssub.s32 128, 128
          %172 = vsyncadd %s163, %s171
          %s173 = smul.addr %s169, 128
          %s174 = scalar_lea.hbm %s1, %s173
          %s176 = sshll.u32 %s166, 4
          %s177 = int_to_ptr.vmem [resolvable:$true] %s176
          %179 = dma.hbm_to_vmem [thread:$0]  %s174, 128, %s177, %s163
        $region24: #{tpu_custom_call.1} parent=15 // pred_fallthru
          _
      $region16: #{tpu_custom_call.1} parent=5 // pred_fallthru
        _
      %p180 = scmp.le.s32.totalorder 1, %s17
      %p181 = scmp.lt.s32.totalorder %s17, 3
      %p182 = pnand %p180, %p181
      %p183 = pneg %p182
      // Predicated region
      $region25: #{tpu_custom_call.1} parent=5 // pred_check
        _
      $region26: #{tpu_custom_call.1} parent=5 // pred_check_branch
        %185 = sbr.rel (%p182) target = $region28
      $region27: #{tpu_custom_call.1} parent=5 // pred_region
        %s186 = ssub.s32 %s17, 1
        %s187 = sand.u32 %s48, 1
        %s188 = scalar_lea.sflag [#allocation3], %s187
        %s189 = sand.u32 %s48, 1
        %s190 = smul.addr %s189, 8
        %s191 = scalar_lea.vmem [#allocation2], %s190
        // Predicated region
        $region29: #{tpu_custom_call.1} parent=27 // pred_check
          %p192 = pneg %p61
        $region30: #{tpu_custom_call.1} parent=27 // pred_check_branch
          %194 = sbr.rel (%p192) target = $region32
        $region31: #{tpu_custom_call.1} parent=27 // pred_region
          %195 = dma.done %s188, 128
        $region32: #{tpu_custom_call.1} parent=27 // pred_fallthru
          _
        %s196 = sand.u32 %s80, 1
        %s197 = scalar_lea.sflag [#allocation6], %s196
        %s198 = sand.u32 %s80, 1
        %s199 = smul.addr %s198, 8
        %s200 = scalar_lea.vmem [#allocation5], %s199
        // Predicated region
        $region33: #{tpu_custom_call.1} parent=27 // pred_check
          %p201 = pneg %p93
        $region34: #{tpu_custom_call.1} parent=27 // pred_check_branch
          %203 = sbr.rel (%p201) target = $region36
        $region35: #{tpu_custom_call.1} parent=27 // pred_region
          %204 = dma.done %s197, 128
        $region36: #{tpu_custom_call.1} parent=27 // pred_fallthru
          _
        %s205 = sand.u32 %s48, 1
        %s206 = scalar_lea.sflag [#allocation3], %s205
        %s207 = sand.u32 %s48, 1
        %s208 = smul.addr %s207, 8
        %s209 = scalar_lea.vmem [#allocation2], %s208
        %p210 = pneg %p61
        %p211 = pneg %p58
        %s212 = sand.u32 %s80, 1
        %s213 = scalar_lea.sflag [#allocation6], %s212
        %s214 = sand.u32 %s80, 1
        %s215 = smul.addr %s214, 8
        %s216 = scalar_lea.vmem [#allocation5], %s215
        %p217 = pneg %p93
        %p218 = pneg %p90
        %p219 = pneg %p119
        %p220 = pneg %p116
        %s221 = sand.u32 %s106, 1
        %s222 = scalar_lea.sflag [#allocation4], %s221
        %s223 = sand.u32 %s106, 1
        %s224 = smul.addr %s223, 8
        %s225 = scalar_lea.vmem [#allocation7], %s224
        %s226 = sadd.s32 %s26, %s27
        %p227 = scmp.lt.s32.totalorder %s226, 1
        %s228 = scalar_select %p227, %s226, 1
        %s229 = sadd.s32 %s26, %s27
        %p230 = scmp.lt.s32.totalorder %s229, 1
        %s231 = scalar_select %p230, %s229, 1
        %p232 = scmp.eq.s32.totalorder %s27, 0
        // Predicated region
        $region37: #{tpu_custom_call.1} parent=27 // pred_check
          %p233 = pneg %p232
        $region38: #{tpu_custom_call.1} parent=27 // pred_check_branch
          %235 = sbr.rel (%p233) target = $region40
        $region39: #{tpu_custom_call.1} parent=27 // pred_region
          %236 = vst [vmem:[%s225] sm:$0xff] 0.0
        $region40: #{tpu_custom_call.1} parent=27 // pred_fallthru
          _
        %v237 = vld [vmem:[%s225] sm:$0xff]
        %v238 = vld [vmem:[%s200] sm:$0xff]
        %v239 = vld [vmem:[%s191] sm:$0xff]
        %v240 = vsub.f32 %v238, %v239
        %v241 = vadd.f32 %v237, %v240
        %242 = vst [vmem:[%s225] sm:$0xff] %v241
        %s243 = sand.u32 %s106, 1
        %s244 = scalar_lea.sflag [#allocation4], %s243
        %s245 = sand.u32 %s106, 1
        %s246 = smul.addr %s245, 8
        %s247 = scalar_lea.vmem [#allocation7], %s246
        // Predicated region
        $region41: #{tpu_custom_call.1} parent=27 // pred_check
          %p248 = pneg %p116
        $region42: #{tpu_custom_call.1} parent=27 // pred_check_branch
          %250 = sbr.rel (%p248) target = $region44
        $region43: #{tpu_custom_call.1} parent=27 // pred_region
          %s252 = ssub.s32 128, 128
          %253 = vsyncadd %s244, %s252
          %s254 = smul.addr %s26, 128
          %s255 = scalar_lea.hbm %s2, %s254
          %s257 = sshll.u32 %s247, 4
          %s258 = int_to_ptr.vmem [resolvable:$true] %s257
          %260 = dma.vmem_to_hbm [thread:$0]  %s258, 128, %s255, %s244
        $region44: #{tpu_custom_call.1} parent=27 // pred_fallthru
          _
      $region28: #{tpu_custom_call.1} parent=5 // pred_fallthru
        _
      %p261 = scmp.le.s32.totalorder 2, %s17
      // Predicated region
      $region45: #{tpu_custom_call.1} parent=5 // pred_check
        %p262 = pneg %p261
      $region46: #{tpu_custom_call.1} parent=5 // pred_check_branch
        %264 = sbr.rel (%p262) target = $region48
      $region47: #{tpu_custom_call.1} parent=5 // pred_region
        %s265 = ssub.s32 %s17, 2
        // Predicated region
        $region49: #{tpu_custom_call.1} parent=47 // pred_check
          %p266 = pneg %p122
        $region50: #{tpu_custom_call.1} parent=47 // pred_check_branch
          %268 = sbr.rel (%p266) target = $region52
        $region51: #{tpu_custom_call.1} parent=47 // pred_region
          %s269 = sand.u32 %s107, 1
          %s270 = scalar_lea.sflag [#allocation4], %s269
          %s271 = sand.u32 %s107, 1
          %s272 = smul.addr %s271, 8
          %s273 = scalar_lea.vmem [#allocation7], %s272
          %274 = dma.done %s270, 128
        $region52: #{tpu_custom_call.1} parent=47 // pred_fallthru
          _
      $region48: #{tpu_custom_call.1} parent=5 // pred_fallthru
        _
    $region6: #{tpu_custom_call.1} parent=1 // loop_footer
      %s21 = sadd.s32 1, %s17
    $region7: #{tpu_custom_call.1} parent=1 // loop_footer_branch
      %16 = sbr.rel target = $region3
    $region8: #{tpu_custom_call.1} parent=1 // loop_exit
      _
    %275 = vsyncpa [#allocation3], 1
    %s276 = scalar_lea.sflag [#allocation3], 1
    %277 = vsyncpa %s276, 1
    %278 = vsyncpa [#allocation6], 1
    %s279 = scalar_lea.sflag [#allocation6], 1
    %280 = vsyncpa %s279, 1
    %281 = vsyncpa [#allocation4], 1
    %s282 = scalar_lea.sflag [#allocation4], 1
    %283 = vsyncpa %s282, 1

</llo_original>
